<compile_context>
chip_gen: v6e
topology: v6e:2x2x1
jax: 0.10.0
libtpu: 0.0.40
codegen_flags: <defaults>
</compile_context>

<pallas_src>
import functools

import jax
import jax.numpy as jnp
from jax.experimental import pallas as pl
from jax.experimental.pallas import tpu as pltpu


def gcn_layer_kernel(adj_ref, x_ref, mask_ref, wt_ref, b_ref, o_ref, *, mxu_dtype):
    adj = adj_ref[...]                        # (Bt, tn, N)  raw adjacency rows
    xm = x_ref[...] * mask_ref[...]           # (Bt, N, H)   masked features

    # Aggregate on the raw adjacency first (batched matmul on the MXU).
    agg = jnp.einsum(
        "bij,bjh->bih",
        adj.astype(mxu_dtype),
        xm.astype(mxu_dtype),
        preferred_element_type=jnp.float32,
    )                                          # (Bt, tn, H)

    # Deferred row-normalization: diag(1/s) @ A @ X == (A @ X) * (1/s).
    # Zero rows of adj produce zero rows of agg, so the s==0 -> 1 guard is exact.
    scale = jnp.sum(adj, axis=-1, keepdims=True)            # (Bt, tn, 1)
    scale = jnp.where(scale == 0.0, jnp.ones_like(scale), scale)
    agg = agg * pl.reciprocal(scale, approx=True)

    # Linear (weight already transposed in the wrapper) + bias + ReLU,
    # flattened over rows so the MXU sees M = Bt*tn instead of tn.
    bt, tn, h = agg.shape
    flat = agg.reshape(bt * tn, h)
    y = jnp.dot(
        flat.astype(mxu_dtype),
        wt_ref[...].astype(mxu_dtype),
        preferred_element_type=jnp.float32,
    )
    y = jnp.maximum(y + b_ref[...], 0.0)
    o_ref[...] = y.reshape(bt, tn, h).astype(o_ref.dtype)


def _largest_divisor_leq(n, cap):
    for d in range(min(n, cap), 0, -1):
        if n % d == 0:
            return d
    return 1


def _pick_row_tile(n, bt, itemsize, budget_bytes=8 * 1024 * 1024):
    """Largest row tile tn (dividing N) whose adjacency tile fits the budget."""
    if bt * n * n * itemsize <= budget_bytes:
        return n
    for t in (4096, 2048, 1024, 512, 256, 128, 64, 32, 16, 8):
        if n % t == 0 and bt * t * n * itemsize <= budget_bytes:
            return t
    return n  # fall back to full rows if N has no friendly divisor


def gcn_layer(adj, nodes_hidden, nodes_mask, weight, bias, *,
              batch_tile=None, row_tile=None, mxu_dtype=jnp.float32):
    B, N, _ = adj.shape
    H = nodes_hidden.shape[-1]
    itemsize = jnp.dtype(adj.dtype).itemsize

    Bt = batch_tile if batch_tile is not None else _largest_divisor_leq(B, 8)
    tn = row_tile if row_tile is not None else _pick_row_tile(N, Bt, itemsize)
    assert B % Bt == 0 and N % tn == 0

    mask3 = nodes_mask.reshape(B, N, 1).astype(nodes_hidden.dtype)
    wt = weight.T                      # one-time transpose: y = x @ W.T -> x @ wt
    bias2 = bias.reshape(1, H)

    # Size the scoped VMEM limit from the chosen tiles (double-buffered I/O).
    adj_tile = Bt * tn * N * itemsize
    x_tile = Bt * N * H * itemsize
    mask_tile = Bt * N * itemsize
    out_tile = Bt * tn * H * itemsize
    param_bytes = (H * H + H) * itemsize
    needed = 2 * (adj_tile + x_tile + mask_tile + out_tile) + param_bytes + (2 << 20)
    vmem_limit = int(min(max(needed, 32 << 20), 64 << 20))

    kernel = functools.partial(gcn_layer_kernel, mxu_dtype=mxu_dtype)

    return pl.pallas_call(
        kernel,
        out_shape=jax.ShapeDtypeStruct((B, N, H), nodes_hidden.dtype),
        grid_spec=pltpu.PrefetchScalarGridSpec(
            num_scalar_prefetch=0,
            grid=(B // Bt, N // tn),
            in_specs=[
                pl.BlockSpec((Bt, tn, N), lambda b, r: (b, r, 0)),   # adjacency rows
                pl.BlockSpec((Bt, N, H), lambda b, r: (b, 0, 0)),    # node features
                pl.BlockSpec((Bt, N, 1), lambda b, r: (b, 0, 0)),    # node mask
                pl.BlockSpec((H, H), lambda b, r: (0, 0)),           # W.T
                pl.BlockSpec((1, H), lambda b, r: (0, 0)),           # bias
            ],
            out_specs=pl.BlockSpec((Bt, tn, H), lambda b, r: (b, r, 0)),
        ),
        compiler_params=pltpu.CompilerParams(
            dimension_semantics=("parallel", "parallel"),
            vmem_limit_bytes=vmem_limit,
        ),
    )(adj, nodes_hidden, mask3, wt, bias2)


def gcn_layer_ref(adj, nodes_hidden, nodes_mask, weight, bias):
    """Pure-JAX reference mirroring the PyTorch forward."""
    scale = adj.sum(axis=-1)
    scale = jnp.where(scale == 0.0, 1.0, scale)
    adj = adj / scale[..., None]
    x = nodes_hidden * nodes_mask[..., None]
    y = jnp.matmul(adj, x) @ weight.T + bias
    return jnp.maximum(y, 0.0)


if __name__ == "__main__":
    key = jax.random.PRNGKey(0)
    B, N, H = 2, 16, 32

    k_adj, k_x, k_mask, k_w, k_b = jax.random.split(key, 5)

    # Sparse-ish binary adjacency (some rows may be all-zero -> exercises the
    # scale==0 -> 1 guard), float features, binary mask.
    adj = (jax.random.uniform(k_adj, (B, N, N)) > 0.7).astype(jnp.float32)
    nodes_hidden = jax.random.normal(k_x, (B, N, H), dtype=jnp.float32)
    nodes_mask = (jax.random.uniform(k_mask, (B, N)) > 0.2).astype(jnp.float32)

    # Deterministic nn.Linear(hidden_size, hidden_size) parameters.
    bound = 1.0 / jnp.sqrt(H)
    weight = jax.random.uniform(k_w, (H, H), minval=-bound, maxval=bound,
                                dtype=jnp.float32)
    bias = jax.random.uniform(k_b, (H,), minval=-bound, maxval=bound,
                              dtype=jnp.float32)

    # TODO(synk): pass mxu_dtype=jnp.bfloat16 on v6e/v7x for ~2x MXU throughput
    # (requires loosening tolerance to ~1e-2 relative).
    out = gcn_layer(adj, nodes_hidden, nodes_mask, weight, bias)
    out = jax.block_until_ready(out)

    ref = gcn_layer_ref(adj, nodes_hidden, nodes_mask, weight, bias)
    assert out.shape == (B, N, H)
    # Slightly looser than 1e-5: deferred normalization uses the EUP approx
    # reciprocal (~1e-6 relative error).
    assert jnp.allclose(out, ref, atol=1e-4, rtol=1e-4), "mismatch vs reference"

    print("KERNEL_OK")
</pallas_src>

<mosaic_0001>
module attributes {stable_mosaic.version = 11 : i64} {
  func.func @gcn_layer_kernel(%arg0: i32, %arg1: i32, %arg2: memref<2x16x16xf32, #tpu.memory_space<vmem>>, %arg3: memref<2x16x32xf32, #tpu.memory_space<vmem>>, %arg4: memref<2x16x1xf32, #tpu.memory_space<vmem>>, %arg5: memref<32x32xf32, #tpu.memory_space<vmem>>, %arg6: memref<1x32xf32, #tpu.memory_space<vmem>>, %arg7: memref<2x16x32xf32, #tpu.memory_space<vmem>>) attributes {dimension_semantics = [#tpu.dimension_semantics<parallel>, #tpu.dimension_semantics<parallel>], iteration_bounds = array<i64: 1, 1>, scalar_prefetch = 0 : i64, scratch_operands = 0 : i64, tpu.core_type = #tpu.core_type<tc>, window_params = [{transform_indices = @transform_0, window_bounds = array<i64: 2, 16, 16>}, {transform_indices = @transform_1, window_bounds = array<i64: 2, 16, 32>}, {transform_indices = @transform_2, window_bounds = array<i64: 2, 16, 1>}, {pipeline_mode = #tpu.pipeline_mode<synchronous>, transform_indices = @transform_3, window_bounds = array<i64: 32, 32>}, {pipeline_mode = #tpu.pipeline_mode<synchronous>, transform_indices = @transform_4, window_bounds = array<i64: 1, 32>}, {transform_indices = @transform_5, window_bounds = array<i64: 2, 16, 32>}]} {
    %c0 = arith.constant 0 : index
    %c0_0 = arith.constant 0 : index
    %c0_1 = arith.constant 0 : index
    %0 = vector.load %arg2[%c0, %c0_0, %c0_1] : memref<2x16x16xf32, #tpu.memory_space<vmem>>, vector<2x16x16xf32>
    %c0_2 = arith.constant 0 : index
    %c0_3 = arith.constant 0 : index
    %c0_4 = arith.constant 0 : index
    %1 = vector.load %arg3[%c0_2, %c0_3, %c0_4] : memref<2x16x32xf32, #tpu.memory_space<vmem>>, vector<2x16x32xf32>
    %c0_5 = arith.constant 0 : index
    %c0_6 = arith.constant 0 : index
    %c0_7 = arith.constant 0 : index
    %2 = vector.load %arg4[%c0_5, %c0_6, %c0_7] : memref<2x16x1xf32, #tpu.memory_space<vmem>>, vector<2x16x1xf32>
    %3 = vector.broadcast %2 : vector<2x16x1xf32> to vector<2x16x32xf32>
    %4 = arith.mulf %1, %3 : vector<2x16x32xf32>
    "tpu.trace_start"() <{level = 10 : i32, message = "bij,bjh->bih"}> : () -> ()
    %cst = arith.constant dense<0.000000e+00> : vector<2x16x32xf32>
    %5 = tpu.matmul %0, %4, %cst {dimension_numbers = #tpu.dot_dimension_numbers<[2], [1], [1], [2], [0, 0, 0, 1, 1, 2], [0], [0]>} : vector<2x16x16xf32>, vector<2x16x32xf32>, vector<2x16x32xf32> -> vector<2x16x32xf32>
    "tpu.trace_stop"() : () -> ()
    %cst_8 = arith.constant dense<0.000000e+00> : vector<2x16xf32>
    %6 = vector.multi_reduction <add>, %0, %cst_8 [2] : vector<2x16x16xf32> to vector<2x16xf32>
    %7 = vector.shape_cast %6 : vector<2x16xf32> to vector<2x16x1xf32>
    %cst_9 = arith.constant 0.000000e+00 : f32
    %8 = vector.broadcast %cst_9 : f32 to vector<2x16x1xf32>
    %9 = arith.cmpf oeq, %7, %8 : vector<2x16x1xf32>
    %cst_10 = arith.constant 1.000000e+00 : f32
    %10 = vector.broadcast %cst_10 : f32 to vector<2x16x1xf32>
    %11 = arith.select %9, %10, %7 : vector<2x16x1xi1>, vector<2x16x1xf32>
    %12 = tpu.reciprocal %11 {approx = true} : vector<2x16x1xf32> -> vector<2x16x1xf32>
    %13 = vector.broadcast %12 : vector<2x16x1xf32> to vector<2x16x32xf32>
    %14 = arith.mulf %5, %13 : vector<2x16x32xf32>
    %15 = vector.shape_cast %14 : vector<2x16x32xf32> to vector<32x32xf32>
    %c0_11 = arith.constant 0 : index
    %c0_12 = arith.constant 0 : index
    %16 = vector.load %arg5[%c0_11, %c0_12] : memref<32x32xf32, #tpu.memory_space<vmem>>, vector<32x32xf32>
    %cst_13 = arith.constant dense<0.000000e+00> : vector<32x32xf32>
    %17 = tpu.matmul %15, %16, %cst_13 {dimension_numbers = #tpu.dot_dimension_numbers<[1], [0], [0], [1], [0, 0, 1, 1], [], []>} : vector<32x32xf32>, vector<32x32xf32>, vector<32x32xf32> -> vector<32x32xf32>
    %c0_14 = arith.constant 0 : index
    %c0_15 = arith.constant 0 : index
    %18 = vector.load %arg6[%c0_14, %c0_15] : memref<1x32xf32, #tpu.memory_space<vmem>>, vector<1x32xf32>
    %19 = vector.broadcast %18 : vector<1x32xf32> to vector<32x32xf32>
    %20 = arith.addf %17, %19 : vector<32x32xf32>
    %cst_16 = arith.constant 0.000000e+00 : f32
    %21 = vector.broadcast %cst_16 : f32 to vector<32x32xf32>
    %22 = arith.maximumf %20, %21 : vector<32x32xf32>
    %23 = vector.shape_cast %22 : vector<32x32xf32> to vector<2x16x32xf32>
    %c0_17 = arith.constant 0 : index
    %c0_18 = arith.constant 0 : index
    %c0_19 = arith.constant 0 : index
    %24 = vector.load %arg7[%c0_17, %c0_18, %c0_19] : memref<2x16x32xf32, #tpu.memory_space<vmem>>, vector<2x16x32xf32>
    tpu.vector_store %arg7[%c0_17, %c0_18, %c0_19], %23 {strides = array<i32>} : memref<2x16x32xf32, #tpu.memory_space<vmem>>, vector<2x16x32xf32>,
    return
  }
  func.func @transform_0(%arg0: i32, %arg1: i32) -> (i32, i32, i32) {
    %c0_i32 = arith.constant 0 : i32
    %c0_i32_0 = arith.constant 0 : i32
    return %arg0, %arg1, %c0_i32 : i32, i32, i32
  }
  func.func @transform_1(%arg0: i32, %arg1: i32) -> (i32, i32, i32) {
    %c0_i32 = arith.constant 0 : i32
    %c0_i32_0 = arith.constant 0 : i32
    %c0_i32_1 = arith.constant 0 : i32
    return %arg0, %c0_i32, %c0_i32_0 : i32, i32, i32
  }
  func.func @transform_2(%arg0: i32, %arg1: i32) -> (i32, i32, i32) {
    %c0_i32 = arith.constant 0 : i32
    %c0_i32_0 = arith.constant 0 : i32
    %c0_i32_1 = arith.constant 0 : i32
    return %arg0, %c0_i32, %c0_i32_0 : i32, i32, i32
  }
  func.func @transform_3(%arg0: i32, %arg1: i32) -> (i32, i32) {
    %c0_i32 = arith.constant 0 : i32
    %c0_i32_0 = arith.constant 0 : i32
    %c0_i32_1 = arith.constant 0 : i32
    return %c0_i32, %c0_i32_0 : i32, i32
  }
  func.func @transform_4(%arg0: i32, %arg1: i32) -> (i32, i32) {
    %c0_i32 = arith.constant 0 : i32
    %c0_i32_0 = arith.constant 0 : i32
    %c0_i32_1 = arith.constant 0 : i32
    return %c0_i32, %c0_i32_0 : i32, i32
  }
  func.func @transform_5(%arg0: i32, %arg1: i32) -> (i32, i32, i32) {
    %c0_i32 = arith.constant 0 : i32
    %c0_i32_0 = arith.constant 0 : i32
    return %arg0, %arg1, %c0_i32 : i32, i32, i32
  }
}

</mosaic_0001>

<llo_original>
// kernel: tpu_custom_call.1
$region0: #{tpu_custom_call.1}
  #allocation0 [shape = 'u32[]', space=smem, size = 0x4, offset = 0x4, fixed_abs, tag = 'smem constant byte address 0x4 - core index']
  #allocation1 [shape = 'u32[144,128]{1,0:T(1,128)}', space=vmem, size = 0x12000, scoped, tag = 'internal scratch']
  %s0 = inlined_call_operand.vmem [shape: f32[2,16,16], index: 0, kind: input, shape index: {}]
  %s1 = inlined_call_operand.hbm [shape: f32[2,16,32], index: 1, kind: input, shape index: {}]
  %s2 = inlined_call_operand.vmem [shape: f32[2,16,1], index: 2, kind: input, shape index: {}]
  %s3 = inlined_call_operand.hbm [shape: f32[32,32], index: 3, kind: input, shape index: {}]
  %s4 = inlined_call_operand.vmem [shape: f32[1,32], index: 4, kind: input, shape index: {}]
  %s5 = inlined_call_operand.hbm [shape: f32[2,16,32], index: 5, kind: output, shape index: {}]
  %s6 = sld [smem:[#allocation0]]
  $region38: #{tpu_custom_call.1} parent=0
    _
  %s8 = ssub.s32 1, %s6
  %s9 = scalar_select 0, %s8, %s6
  $region1: #{tpu_custom_call.1} parent=0
    #allocation2 [shape = 'u8[16384]{0}', space=vmem, size = 0x4000, scoped, tag = 'input window, operand 1, single buffered']
    #allocation3 [shape = 's32[1]{0}', space=sflag, size = 0x4, scoped, tag = 'scoped memory for tpu_custom_call.1']
    #allocation4 [shape = 's32[1]{0}', space=sflag, size = 0x4, scoped, tag = 'scoped memory for tpu_custom_call.1']
    #allocation5 [shape = 'u8[16384]{0}', space=vmem, size = 0x4000, scoped, tag = 'input window, operand 3, single buffered']
    #allocation6 [shape = 's32[1]{0}', space=sflag, size = 0x4, scoped, tag = 'scoped memory for tpu_custom_call.1']
    #allocation7 [shape = 'u8[16384]{0}', space=vmem, size = 0x4000, scoped, tag = 'output window, operand 0, single buffered']
    %10 = vsyncpa [#allocation3], 0
    %11 = vsyncpa [#allocation6], 0
    %12 = vsyncpa [#allocation4], 0
    // Predicated region
    $region2: #{tpu_custom_call.1} parent=1 // pred_check
      _
    $region3: #{tpu_custom_call.1} parent=1 // pred_check_branch
      %14 = sbr.rel (0) target = $region5
    $region4: #{tpu_custom_call.1} parent=1 // pred_region
      _
    $region5: #{tpu_custom_call.1} parent=1 // pred_fallthru
      _
    // Predicated region
    $region6: #{tpu_custom_call.1} parent=1 // pred_check
      _
    $region7: #{tpu_custom_call.1} parent=1 // pred_check_branch
      %16 = sbr.rel (0) target = $region9
    $region8: #{tpu_custom_call.1} parent=1 // pred_region
      %s18 = ssub.s32 512, 512
      %19 = vsyncadd [#allocation3], %s18
      %s20 = sshll.u32 [#allocation2], 4
      %s21 = int_to_ptr.vmem [resolvable:$true] %s20
      %26 = dma.hbm_to_vmem [thread:$0]  %s1, 512, %s21, [#allocation3], 128, 128, 8
    $region9: #{tpu_custom_call.1} parent=1 // pred_fallthru
      _
    // Predicated region
    $region10: #{tpu_custom_call.1} parent=1 // pred_check
      _
    $region11: #{tpu_custom_call.1} parent=1 // pred_check_branch
      %28 = sbr.rel (0) target = $region13
    $region12: #{tpu_custom_call.1} parent=1 // pred_region
      _
    $region13: #{tpu_custom_call.1} parent=1 // pred_fallthru
      _
    // Predicated region
    $region14: #{tpu_custom_call.1} parent=1 // pred_check
      _
    $region15: #{tpu_custom_call.1} parent=1 // pred_check_branch
      %30 = sbr.rel (0) target = $region17
    $region16: #{tpu_custom_call.1} parent=1 // pred_region
      %s32 = ssub.s32 512, 512
      %33 = vsyncadd [#allocation6], %s32
      %s34 = sshll.u32 [#allocation5], 4
      %s35 = int_to_ptr.vmem [resolvable:$true] %s34
      %40 = dma.hbm_to_vmem [thread:$0]  %s3, 512, %s35, [#allocation6], 128, 128, 8
    $region17: #{tpu_custom_call.1} parent=1 // pred_fallthru
      _
    // Predicated region
    $region18: #{tpu_custom_call.1} parent=1 // pred_check
      _
    $region19: #{tpu_custom_call.1} parent=1 // pred_check_branch
      %42 = sbr.rel (0) target = $region21
    $region20: #{tpu_custom_call.1} parent=1 // pred_region
      _
    $region21: #{tpu_custom_call.1} parent=1 // pred_fallthru
      _
    // Predicated region
    $region22: #{tpu_custom_call.1} parent=1 // pred_check
      _
    $region23: #{tpu_custom_call.1} parent=1 // pred_check_branch
      %44 = sbr.rel (0) target = $region25
    $region24: #{tpu_custom_call.1} parent=1 // pred_region
      %45 = dma.done [#allocation3], 512
    $region25: #{tpu_custom_call.1} parent=1 // pred_fallthru
      _
    // Predicated region
    $region26: #{tpu_custom_call.1} parent=1 // pred_check
      _
    $region27: #{tpu_custom_call.1} parent=1 // pred_check_branch
      %47 = sbr.rel (0) target = $region29
    $region28: #{tpu_custom_call.1} parent=1 // pred_region
      %48 = dma.done [#allocation6], 512
    $region29: #{tpu_custom_call.1} parent=1 // pred_fallthru
      _
    %v49 = vld [vmem:[%s0] sm:$0xff]
    %v50 = vld [vmem:[%s0 + $0x8] sm:$0xff]
    %v51 = vld [vmem:[%s0 + $0x10] sm:$0xff]
    %v52 = vld [vmem:[%s0 + $0x18] sm:$0xff]
    %v53 = vld [vmem:[#allocation2] sm:$0xff]
    %v54 = vld [vmem:[#allocation2 + $0x8] sm:$0xff]
    %v55 = vld [vmem:[#allocation2 + $0x10] sm:$0xff]
    %v56 = vld [vmem:[#allocation2 + $0x18] sm:$0xff]
    %v57 = vld [vmem:[%s2] sm:$0xff]
    %v58 = vld [vmem:[%s2 + $0x8] sm:$0xff]
    %v59 = vld [vmem:[%s2 + $0x10] sm:$0xff]
    %v60 = vld [vmem:[%s2 + $0x18] sm:$0xff]
    %62 = vset.pattern.permute.xlu0 0
    %63 = vperm.xlu0 %62, %v57
    %v64 = vpop.permute.xlu0 %63
    %67 = vset.pattern.permute.xlu0 0
    %68 = vperm.xlu0 %67, %v58
    %v69 = vpop.permute.xlu0 %68
    %72 = vset.pattern.permute.xlu0 0
    %73 = vperm.xlu0 %72, %v59
    %v74 = vpop.permute.xlu0 %73
    %77 = vset.pattern.permute.xlu0 0
    %78 = vperm.xlu0 %77, %v60
    %v79 = vpop.permute.xlu0 %78
    %v81 = vmul.f32 %v53, %v64
    %v82 = vmul.f32 %v54, %v69
    %v83 = vmul.f32 %v55, %v74
    %v84 = vmul.f32 %v56, %v79
    %vm85 = vcmask 130048
    %v87 = vsel %vm85, %v49, 0
    %v90 = vsel %vm85, %v50, 0
    %92 = vmatprep.subr.mxu0 0.0
    %93 = vmatpush1.msra.mxu0 0.0
    %94 = vmatprep.subr.mxu0 0.0
    %95 = vmatpush1.msra.mxu0 0.0
    %96 = vmatprep.subr.mxu0 0.0
    %97 = vmatpush1.msra.mxu0 0.0
    %98 = vmatprep.subr.mxu0 0.0
    %99 = vmatpush1.msra.mxu0 0.0
    %100 = vmatprep.subr.mxu0 0.0
    %101 = vmatpush1.msra.mxu0 0.0
    %102 = vmatprep.subr.mxu0 0.0
    %103 = vmatpush1.msra.mxu0 0.0
    %104 = vmatprep.subr.mxu0 0.0
    %105 = vmatpush1.msra.mxu0 0.0
    %106 = vmatprep.subr.mxu0 0.0
    %107 = vmatpush1.msra.mxu0 0.0
    %108 = vmatprep.subr.mxu0 0.0
    %109 = vmatpush1.msra.mxu0 0.0
    %110 = vmatprep.subr.mxu0 0.0
    %111 = vmatpush1.msra.mxu0 0.0
    %112 = vmatprep.subr.mxu0 0.0
    %113 = vmatpush1.msra.mxu0 0.0
    %114 = vmatprep.subr.mxu0 0.0
    %115 = vmatpush1.msra.mxu0 0.0
    %116 = vmatprep.subr.mxu0 0.0
    %117 = vmatpush1.msra.mxu0 0.0
    %118 = vmatprep.subr.mxu0 0.0
    %119 = vmatpush1.msra.mxu0 0.0
    %120 = vmatprep.subr.mxu0 0.0
    %121 = vmatpush1.msra.mxu0 %v82
    %122 = vmatprep.subr.mxu0 0.0
    %123 = vmatpush1.msra.mxu0 %v81
    %124 = vmatprep.subr.mxu0 0.0
    %125 = vmatpush2.msra.mxu0 0.0
    %126 = vmatprep.subr.mxu0 0.0
    %127 = vmatpush2.msra.mxu0 0.0
    %128 = vmatprep.subr.mxu0 0.0
    %129 = vmatpush2.msra.mxu0 0.0
    %130 = vmatprep.subr.mxu0 0.0
    %131 = vmatpush2.msra.mxu0 0.0
    %132 = vmatprep.subr.mxu0 0.0
    %133 = vmatpush2.msra.mxu0 0.0
    %134 = vmatprep.subr.mxu0 0.0
    %135 = vmatpush2.msra.mxu0 0.0
    %136 = vmatprep.subr.mxu0 0.0
    %137 = vmatpush2.msra.mxu0 0.0
    %138 = vmatprep.subr.mxu0 0.0
    %139 = vmatpush2.msra.mxu0 0.0
    %140 = vmatprep.subr.mxu0 0.0
    %141 = vmatpush2.msra.mxu0 0.0
    %142 = vmatprep.subr.mxu0 0.0
    %143 = vmatpush2.msra.mxu0 0.0
    %144 = vmatprep.subr.mxu0 0.0
    %145 = vmatpush2.msra.mxu0 0.0
    %146 = vmatprep.subr.mxu0 0.0
    %147 = vmatpush2.msra.mxu0 0.0
    %148 = vmatprep.subr.mxu0 0.0
    %149 = vmatpush2.msra.mxu0 0.0
    %150 = vmatprep.subr.mxu0 0.0
    %151 = vmatpush2.msra.mxu0 0.0
    %152 = vmatprep.subr.mxu0 0.0
    %153 = vmatpush2.msra.mxu0 0.0
    %154 = vmatprep.subr.mxu0 0.0
    %155 = vmatpush2.msra.mxu0 0.0
    %156 = vmatprep.mubr.f32.mxu0 0.0
    %157 = vmatmul.mubr.f32.gmra.mxu0 %v87
    %v158 = vpop.f32.mrf.mxu0
    %v159 = vadd.f32 0.0, %v158
    %v160 = vpop.f32.mrf.mxu0
    %161 = vmatprep.mubr.f32.mxu0 0.0
    %162 = vmatmul.mubr.f32.gmra.mxu0 %v90
    %v163 = vpop.f32.mrf.mxu0
    %v164 = vadd.f32 0.0, %v163
    %v165 = vpop.f32.mrf.mxu0
    %166 = vdwg.mxu0
    %v168 = vsel %vm85, %v51, 0
    %v171 = vsel %vm85, %v52, 0
    %173 = vmatprep.subr.mxu0 0.0
    %174 = vmatpush1.msra.mxu0 0.0
    %175 = vmatprep.subr.mxu0 0.0
    %176 = vmatpush1.msra.mxu0 0.0
    %177 = vmatprep.subr.mxu0 0.0
    %178 = vmatpush1.msra.mxu0 0.0
    %179 = vmatprep.subr.mxu0 0.0
    %180 = vmatpush1.msra.mxu0 0.0
    %181 = vmatprep.subr.mxu0 0.0
    %182 = vmatpush1.msra.mxu0 0.0
    %183 = vmatprep.subr.mxu0 0.0
    %184 = vmatpush1.msra.mxu0 0.0
    %185 = vmatprep.subr.mxu0 0.0
    %186 = vmatpush1.msra.mxu0 0.0
    %187 = vmatprep.subr.mxu0 0.0
    %188 = vmatpush1.msra.mxu0 0.0
    %189 = vmatprep.subr.mxu0 0.0
    %190 = vmatpush1.msra.mxu0 0.0
    %191 = vmatprep.subr.mxu0 0.0
    %192 = vmatpush1.msra.mxu0 0.0
    %193 = vmatprep.subr.mxu0 0.0
    %194 = vmatpush1.msra.mxu0 0.0
    %195 = vmatprep.subr.mxu0 0.0
    %196 = vmatpush1.msra.mxu0 0.0
    %197 = vmatprep.subr.mxu0 0.0
    %198 = vmatpush1.msra.mxu0 0.0
    %199 = vmatprep.subr.mxu0 0.0
    %200 = vmatpush1.msra.mxu0 0.0
    %201 = vmatprep.subr.mxu0 0.0
    %202 = vmatpush1.msra.mxu0 %v84
    %203 = vmatprep.subr.mxu0 0.0
    %204 = vmatpush1.msra.mxu0 %v83
    %205 = vmatprep.subr.mxu0 0.0
    %206 = vmatpush2.msra.mxu0 0.0
    %207 = vmatprep.subr.mxu0 0.0
    %208 = vmatpush2.msra.mxu0 0.0
    %209 = vmatprep.subr.mxu0 0.0
    %210 = vmatpush2.msra.mxu0 0.0
    %211 = vmatprep.subr.mxu0 0.0
    %212 = vmatpush2.msra.mxu0 0.0
    %213 = vmatprep.subr.mxu0 0.0
    %214 = vmatpush2.msra.mxu0 0.0
    %215 = vmatprep.subr.mxu0 0.0
    %216 = vmatpush2.msra.mxu0 0.0
    %217 = vmatprep.subr.mxu0 0.0
    %218 = vmatpush2.msra.mxu0 0.0
    %219 = vmatprep.subr.mxu0 0.0
    %220 = vmatpush2.msra.mxu0 0.0
    %221 = vmatprep.subr.mxu0 0.0
    %222 = vmatpush2.msra.mxu0 0.0
    %223 = vmatprep.subr.mxu0 0.0
    %224 = vmatpush2.msra.mxu0 0.0
    %225 = vmatprep.subr.mxu0 0.0
    %226 = vmatpush2.msra.mxu0 0.0
    %227 = vmatprep.subr.mxu0 0.0
    %228 = vmatpush2.msra.mxu0 0.0
    %229 = vmatprep.subr.mxu0 0.0
    %230 = vmatpush2.msra.mxu0 0.0
    %231 = vmatprep.subr.mxu0 0.0
    %232 = vmatpush2.msra.mxu0 0.0
    %233 = vmatprep.subr.mxu0 0.0
    %234 = vmatpush2.msra.mxu0 0.0
    %235 = vmatprep.subr.mxu0 0.0
    %236 = vmatpush2.msra.mxu0 0.0
    %237 = vmatprep.mubr.f32.mxu0 0.0
    %238 = vmatmul.mubr.f32.gmra.mxu0 %v168
    %v239 = vpop.f32.mrf.mxu0
    %v240 = vadd.f32 0.0, %v239
    %v241 = vpop.f32.mrf.mxu0
    %242 = vmatprep.mubr.f32.mxu0 0.0
    %243 = vmatmul.mubr.f32.gmra.mxu0 %v171
    %v244 = vpop.f32.mrf.mxu0
    %v245 = vadd.f32 0.0, %v244
    %v246 = vpop.f32.mrf.mxu0
    %247 = vdwg.mxu0
    %v248 = vsel %vm85, %v49, 0.0
    %249 = vadd.xlane.f32.xlu0 %v248
    %v250 = vpop.xlane.xlu0 %249
    %v251 = vsel %vm85, %v50, 0.0
    %252 = vadd.xlane.f32.xlu0 %v251
    %v253 = vpop.xlane.xlu0 %252
    %v254 = vsel %vm85, %v51, 0.0
    %255 = vadd.xlane.f32.xlu0 %v254
    %v256 = vpop.xlane.xlu0 %255
    %v257 = vsel %vm85, %v52, 0.0
    %258 = vadd.xlane.f32.xlu0 %v257
    %v259 = vpop.xlane.xlu0 %258
    %vm260 = vcmp.eq.f32.partialorder %v250, 0.0
    %vm261 = vcmp.eq.f32.partialorder %v253, 0.0
    %vm262 = vcmp.eq.f32.partialorder %v256, 0.0
    %vm263 = vcmp.eq.f32.partialorder %v259, 0.0
    %v264 = vsel %vm260, 1.0, %v250
    %v265 = vsel %vm261, 1.0, %v253
    %v266 = vsel %vm262, 1.0, %v256
    %v267 = vsel %vm263, 1.0, %v259
    %v268 = vrcp.pop %v264
    %v269 = vrcp.pop %v265
    %v270 = vrcp.pop %v266
    %v271 = vrcp.pop %v267
    %v272 = vmul.f32 %v159, %v268
    %v273 = vmul.f32 %v164, %v269
    %v274 = vmul.f32 %v240, %v270
    %v275 = vmul.f32 %v245, %v271
    %v276 = vld [vmem:[#allocation5] sm:$0xff]
    %v277 = vld [vmem:[#allocation5 + $0x8] sm:$0xff]
    %v278 = vld [vmem:[#allocation5 + $0x10] sm:$0xff]
    %v279 = vld [vmem:[#allocation5 + $0x18] sm:$0xff]
    %v280 = vld [vmem:[%s4] sm:$0x1]
    %v282 = vlaneseq
    %v283 = vshrl.u32 %v282, 7
    %v284 = vsub.s32 0, %v283
    %v285 = vrot.slane %v280, %v284
    %vm287 = vcmask 261120
    %v289 = vsel %vm287, %v272, 0
    %v292 = vsel %vm287, %v273, 0
    %v295 = vsel %vm287, %v274, 0
    %v298 = vsel %vm287, %v275, 0
    %300 = vmatprep.subr.mxu0 0.0
    %301 = vmatpush1.msra.mxu0 0.0
    %302 = vmatprep.subr.mxu0 0.0
    %303 = vmatpush1.msra.mxu0 0.0
    %304 = vmatprep.subr.mxu0 0.0
    %305 = vmatpush1.msra.mxu0 0.0
    %306 = vmatprep.subr.mxu0 0.0
    %307 = vmatpush1.msra.mxu0 0.0
    %308 = vmatprep.subr.mxu0 0.0
    %309 = vmatpush1.msra.mxu0 0.0
    %310 = vmatprep.subr.mxu0 0.0
    %311 = vmatpush1.msra.mxu0 0.0
    %312 = vmatprep.subr.mxu0 0.0
    %313 = vmatpush1.msra.mxu0 0.0
    %314 = vmatprep.subr.mxu0 0.0
    %315 = vmatpush1.msra.mxu0 0.0
    %316 = vmatprep.subr.mxu0 0.0
    %317 = vmatpush1.msra.mxu0 0.0
    %318 = vmatprep.subr.mxu0 0.0
    %319 = vmatpush1.msra.mxu0 0.0
    %320 = vmatprep.subr.mxu0 0.0
    %321 = vmatpush1.msra.mxu0 0.0
    %322 = vmatprep.subr.mxu0 0.0
    %323 = vmatpush1.msra.mxu0 0.0
    %324 = vmatprep.subr.mxu0 0.0
    %325 = vmatpush1.msra.mxu0 %v279
    %326 = vmatprep.subr.mxu0 0.0
    %327 = vmatpush1.msra.mxu0 %v278
    %328 = vmatprep.subr.mxu0 0.0
    %329 = vmatpush1.msra.mxu0 %v277
    %330 = vmatprep.subr.mxu0 0.0
    %331 = vmatpush1.msra.mxu0 %v276
    %332 = vmatprep.subr.mxu0 0.0
    %333 = vmatpush2.msra.mxu0 0.0
    %334 = vmatprep.subr.mxu0 0.0
    %335 = vmatpush2.msra.mxu0 0.0
    %336 = vmatprep.subr.mxu0 0.0
    %337 = vmatpush2.msra.mxu0 0.0
    %338 = vmatprep.subr.mxu0 0.0
    %339 = vmatpush2.msra.mxu0 0.0
    %340 = vmatprep.subr.mxu0 0.0
    %341 = vmatpush2.msra.mxu0 0.0
    %342 = vmatprep.subr.mxu0 0.0
    %343 = vmatpush2.msra.mxu0 0.0
    %344 = vmatprep.subr.mxu0 0.0
    %345 = vmatpush2.msra.mxu0 0.0
    %346 = vmatprep.subr.mxu0 0.0
    %347 = vmatpush2.msra.mxu0 0.0
    %348 = vmatprep.subr.mxu0 0.0
    %349 = vmatpush2.msra.mxu0 0.0
    %350 = vmatprep.subr.mxu0 0.0
    %351 = vmatpush2.msra.mxu0 0.0
    %352 = vmatprep.subr.mxu0 0.0
    %353 = vmatpush2.msra.mxu0 0.0
    %354 = vmatprep.subr.mxu0 0.0
    %355 = vmatpush2.msra.mxu0 0.0
    %356 = vmatprep.subr.mxu0 0.0
    %357 = vmatpush2.msra.mxu0 0.0
    %358 = vmatprep.subr.mxu0 0.0
    %359 = vmatpush2.msra.mxu0 0.0
    %360 = vmatprep.subr.mxu0 0.0
    %361 = vmatpush2.msra.mxu0 0.0
    %362 = vmatprep.subr.mxu0 0.0
    %363 = vmatpush2.msra.mxu0 0.0
    %364 = vmatprep.mubr.f32.mxu0 0.0
    %365 = vmatmul.mubr.f32.gmra.mxu0 %v289
    %v366 = vpop.f32.mrf.mxu0
    %v367 = vadd.f32 %v285, %v366
    %v368 = vpop.f32.mrf.mxu0
    %369 = vmatprep.mubr.f32.mxu0 0.0
    %370 = vmatmul.mubr.f32.gmra.mxu0 %v292
    %v371 = vpop.f32.mrf.mxu0
    %v372 = vadd.f32 %v285, %v371
    %v373 = vpop.f32.mrf.mxu0
    %374 = vmatprep.mubr.f32.mxu0 0.0
    %375 = vmatmul.mubr.f32.gmra.mxu0 %v295
    %v376 = vpop.f32.mrf.mxu0
    %v377 = vadd.f32 %v285, %v376
    %v378 = vpop.f32.mrf.mxu0
    %379 = vmatprep.mubr.f32.mxu0 0.0
    %380 = vmatmul.mubr.f32.gmra.mxu0 %v298
    %v381 = vpop.f32.mrf.mxu0
    %v382 = vadd.f32 %v285, %v381
    %v383 = vpop.f32.mrf.mxu0
    %384 = vdwg.mxu0
    %v385 = vmax.f32 %v367, 0.0
    %v386 = vmax.f32 %v372, 0.0
    %v387 = vmax.f32 %v377, 0.0
    %v388 = vmax.f32 %v382, 0.0
    %389 = vst.msk [vmem:[#allocation7] sm:$0xff] %vm287, %v385
    %390 = vst.msk [vmem:[#allocation7 + $0x8] sm:$0xff] %vm287, %v386
    %391 = vst.msk [vmem:[#allocation7 + $0x10] sm:$0xff] %vm287, %v387
    %392 = vst.msk [vmem:[#allocation7 + $0x18] sm:$0xff] %vm287, %v388
    // Predicated region
    $region30: #{tpu_custom_call.1} parent=1 // pred_check
      _
    $region31: #{tpu_custom_call.1} parent=1 // pred_check_branch
      %394 = sbr.rel (0) target = $region33
    $region32: #{tpu_custom_call.1} parent=1 // pred_region
      %s396 = ssub.s32 512, 512
      %397 = vsyncadd [#allocation4], %s396
      %s398 = sshll.u32 [#allocation7], 4
      %s399 = int_to_ptr.vmem [resolvable:$true] %s398
      %404 = dma.vmem_to_hbm [thread:$0]  %s399, 512, %s5, [#allocation4], 128, 128, 8
    $region33: #{tpu_custom_call.1} parent=1 // pred_fallthru
      _
    // Predicated region
    $region34: #{tpu_custom_call.1} parent=1 // pred_check
      _
    $region35: #{tpu_custom_call.1} parent=1 // pred_check_branch
      %406 = sbr.rel (0) target = $region37
    $region36: #{tpu_custom_call.1} parent=1 // pred_region
      %407 = dma.done [#allocation4], 512
    $region37: #{tpu_custom_call.1} parent=1 // pred_fallthru
      _
    %408 = vsyncpa [#allocation3], 1
    %409 = vsyncpa [#allocation6], 1
    %410 = vsyncpa [#allocation4], 1

</llo_original>
